<compile_context>
chip_gen: v5e
topology: v5e:2x2
jax: 0.10.0
libtpu: 0.0.40
codegen_flags: <defaults>
</compile_context>

<pallas_src>
import jax
import jax.numpy as jnp
from jax.experimental import pallas as pl
from jax.experimental.pallas import tpu as pltpu


def _round_up(x, m):
    return ((x + m - 1) // m) * m


# ----------------------------- fused FFN kernel -----------------------------

def _ffn_kernel(x_ref, w1_ref, b1_ref, w2_ref, b2_ref, o_ref, acc_ref):
    """One (row-tile, d_ff-tile) step of y = relu(x @ w1 + b1) @ w2 + b2."""
    j = pl.program_id(1)

    @pl.when(j == 0)
    def _():
        acc_ref[...] = jnp.zeros_like(acc_ref)

    # First matmul: (tm, d_model) @ (d_model, tf) -> f32 (tm, tf).
    # Operands already arrive in the compute dtype (bf16) - no in-kernel casts.
    h = jnp.dot(x_ref[...], w1_ref[...], preferred_element_type=jnp.float32)
    # Bias + ReLU epilogue in f32 (d_ff is the *output* axis of this matmul,
    # tiled by j, so each column gets its bias exactly once).
    h = jnp.maximum(h + b1_ref[...], 0.0)

    # Second matmul: (tm, tf) @ (tf, d_model), accumulated over the d_ff tiles.
    acc_ref[...] += jnp.dot(h.astype(w2_ref.dtype), w2_ref[...],
                            preferred_element_type=jnp.float32)

    @pl.when(j == pl.num_programs(1) - 1)
    def _():
        o_ref[...] = (acc_ref[...] + b2_ref[...]).astype(o_ref.dtype)


# -------------------------- generation-aware config --------------------------

def _tpu_config():
    """(vmem_capacity_bytes, tm_max, tf_align, want_multi_row_tiles)."""
    kind = ""
    try:
        kind = jax.devices()[0].device_kind.lower()
    except Exception:
        pass

    vmem_cap = 0
    try:
        vmem_cap = int(pltpu.get_tpu_info().vmem_capacity_bytes)
    except Exception:
        vmem_cap = 0
    if vmem_cap <= 0:
        if "v7" in kind:
            vmem_cap = 64 * 1024 * 1024
        elif "v5" in kind or "v6" in kind:
            vmem_cap = 128 * 1024 * 1024
        else:
            vmem_cap = 64 * 1024 * 1024          # conservative default

    if "v7" in kind:
        return vmem_cap, 512, 256, True          # 2 TCs: want >= 2 row tiles
    if "v6" in kind:
        return vmem_cap, 512, 256, False
    if "v5" in kind:
        return vmem_cap, 256, 128, False
    return vmem_cap, 256, 128, False


# --------------------------------- wrapper -----------------------------------

def feed_forward(x, w1, b1, w2, b2, *, compute_dtype=jnp.bfloat16,
                 out_dtype=None, tf_max=512):
    """y = relu(x @ w1 + b1) @ w2 + b2, fused in one Pallas kernel.

    x : [..., d_model]; w1 : [d_model, d_ff]; w2 : [d_ff, d_model].
    Dropout is identity (eval mode).  MXU operands are bf16 (cast once here),
    accumulation and bias/ReLU epilogue are f32, output is x.dtype by default.
    """
    # TODO(synk): training-mode dropout (pltpu.prng_*) not implemented; the
    # reference module is evaluated deterministically.
    orig_shape = x.shape
    d_model = orig_shape[-1]
    d_ff = w1.shape[1]
    assert w1.shape == (d_model, d_ff)
    assert w2.shape == (d_ff, d_model)
    out_dtype = x.dtype if out_dtype is None else out_dtype

    vmem_cap, tm_max, tf_align, want_multi = _tpu_config()

    # Cast operands to the compute dtype once, outside the hot path.
    x2d = x.reshape(-1, d_model).astype(compute_dtype)
    w1c = w1.astype(compute_dtype)
    w2c = w2.astype(compute_dtype)
    b1f = b1.astype(jnp.float32).reshape(1, d_ff)
    b2f = b2.astype(jnp.float32).reshape(1, d_model)
    M = x2d.shape[0]

    # ---- d_ff (reduction) tiling; zero-pad if no aligned divisor exists.
    if d_ff <= tf_max:
        tf, d_ff_pad = d_ff, d_ff
    else:
        tf = 0
        t = (tf_max // tf_align) * tf_align
        while t >= tf_align:
            if d_ff % t == 0:
                tf = t
                break
            t -= tf_align
        if tf:
            d_ff_pad = d_ff
        else:
            tf = (tf_max // tf_align) * tf_align
            d_ff_pad = _round_up(d_ff, tf)
    if d_ff_pad != d_ff:
        pad = d_ff_pad - d_ff
        # zero columns of w1 -> relu(0+0)=0 -> contribute nothing to acc.
        w1c = jnp.pad(w1c, ((0, 0), (0, pad)))
        b1f = jnp.pad(b1f, ((0, 0), (0, pad)))
        w2c = jnp.pad(w2c, ((0, pad), (0, 0)))

    # ---- row tiling: VMEM-budget aware, padded to sublane multiples of 8.
    cb = jnp.dtype(compute_dtype).itemsize
    ob = jnp.dtype(out_dtype).itemsize
    weight_block_bytes = (2 * (d_model * tf + tf * d_model) * cb   # w1/w2 (dbl buf)
                          + 2 * (tf + d_model) * 4)                # biases
    per_row_bytes = d_model * (2 * cb + 2 * ob + 4)   # x + out (dbl buf) + f32 acc
    budget = int(vmem_cap - vmem_cap // 8)            # leave headroom
    tm_fit = ((budget - weight_block_bytes) // max(per_row_bytes, 1)) // 8 * 8
    tm_cap = max(8, min(tm_max, tm_fit))

    M8 = _round_up(max(M, 1), 8)
    if want_multi and M8 >= 16:
        # keep >= 2 row tiles so both v7x TensorCores get work on the
        # "parallel" axis.
        tm_cap = min(tm_cap, max(8, (M8 // 2) // 8 * 8))
    tm = min(tm_cap, M8)
    M_pad = _round_up(M8, tm)
    if M_pad != M:
        x2d = jnp.pad(x2d, ((0, M_pad - M), (0, 0)))

    grid = (M_pad // tm, d_ff_pad // tf)
    n_row_tiles = grid[0]

    # Advisory cost estimate (weights are re-streamed once per row tile).
    flops = 4 * M_pad * d_model * d_ff_pad            # two matmuls
    bytes_accessed = int(M_pad * d_model * (cb + ob)
                         + n_row_tiles * (2 * d_model * d_ff_pad * cb
                                          + d_ff_pad * 4)
                         + d_model * 4)

    vmem_est = (2 * tm * d_model * cb                 # x blocks (dbl buf)
                + weight_block_bytes                  # w1/w2/biases
                + 2 * tm * d_model * ob               # out blocks (dbl buf)
                + tm * d_model * 4)                   # f32 accumulator
    vmem_limit = int(min(max(2 * vmem_est + (1 << 20), 32 * 1024 * 1024),
                         budget))

    y = pl.pallas_call(
        _ffn_kernel,
        out_shape=jax.ShapeDtypeStruct((M_pad, d_model), out_dtype),
        grid=grid,
        in_specs=[
            pl.BlockSpec((tm, d_model), lambda i, j: (i, 0)),   # x rows
            pl.BlockSpec((d_model, tf), lambda i, j: (0, j)),   # w1 cols
            pl.BlockSpec((1, tf),       lambda i, j: (0, j)),   # b1 slice
            pl.BlockSpec((tf, d_model), lambda i, j: (j, 0)),   # w2 rows
            pl.BlockSpec((1, d_model),  lambda i, j: (0, 0)),   # b2
        ],
        out_specs=pl.BlockSpec((tm, d_model), lambda i, j: (i, 0)),
        scratch_shapes=[pltpu.VMEM((tm, d_model), jnp.float32)],
        compiler_params=pltpu.CompilerParams(
            dimension_semantics=("parallel", "arbitrary"),
            vmem_limit_bytes=vmem_limit),
        cost_estimate=pl.CostEstimate(flops=flops, transcendentals=0,
                                      bytes_accessed=bytes_accessed),
    )(x2d, w1c, b1f, w2c, b2f)

    if M_pad != M:
        y = y[:M]
    return y.reshape(orig_shape[:-1] + (d_model,))


# ---------------------------------- main ------------------------------------

if __name__ == "__main__":
    d_model = 32
    d_ff = d_model * 4
    bs, seq = 2, 8

    key = jax.random.PRNGKey(0)
    kx, k1, kb1, k2, kb2 = jax.random.split(key, 5)
    x = jax.random.normal(kx, (bs, seq, d_model), dtype=jnp.float32)
    w1 = 0.02 * jax.random.normal(k1, (d_model, d_ff), dtype=jnp.float32)
    b1 = 0.02 * jax.random.normal(kb1, (d_ff,), dtype=jnp.float32)
    w2 = 0.02 * jax.random.normal(k2, (d_ff, d_model), dtype=jnp.float32)
    b2 = 0.02 * jax.random.normal(kb2, (d_model,), dtype=jnp.float32)

    out = feed_forward(x, w1, b1, w2, b2)
    out = jax.block_until_ready(out)

    # Pure-JAX f32 reference (loose tolerance: kernel uses bf16 MXU operands).
    ref = (jnp.maximum(x.reshape(-1, d_model) @ w1 + b1, 0.0) @ w2 + b2)
    ref = ref.reshape(bs, seq, d_model)

    assert out.shape == (bs, seq, d_model)
    assert bool(jnp.all(jnp.isfinite(out)))
    assert bool(jnp.allclose(out, ref, rtol=5e-2, atol=5e-3))
    print("KERNEL_OK")
</pallas_src>

<mosaic_0001>
module attributes {stable_mosaic.version = 11 : i64} {
  func.func @_ffn_kernel(%arg0: i32, %arg1: i32, %arg2: memref<16x32xbf16, #tpu.memory_space<vmem>>, %arg3: memref<32x128xbf16, #tpu.memory_space<vmem>>, %arg4: memref<1x128xf32, #tpu.memory_space<vmem>>, %arg5: memref<128x32xbf16, #tpu.memory_space<vmem>>, %arg6: memref<1x32xf32, #tpu.memory_space<vmem>>, %arg7: memref<16x32xf32, #tpu.memory_space<vmem>>, %arg8: memref<16x32xf32, #tpu.memory_space<vmem>>) attributes {dimension_semantics = [#tpu.dimension_semantics<parallel>, #tpu.dimension_semantics<arbitrary>], iteration_bounds = array<i64: 1, 1>, scalar_prefetch = 0 : i64, scratch_operands = 1 : i64, tpu.core_type = #tpu.core_type<tc>, window_params = [{transform_indices = @transform_0, window_bounds = array<i64: 16, 32>}, {transform_indices = @transform_1, window_bounds = array<i64: 32, 128>}, {transform_indices = @transform_2, window_bounds = array<i64: 1, 128>}, {transform_indices = @transform_3, window_bounds = array<i64: 128, 32>}, {pipeline_mode = #tpu.pipeline_mode<synchronous>, transform_indices = @transform_4, window_bounds = array<i64: 1, 32>}, {transform_indices = @transform_5, window_bounds = array<i64: 16, 32>}]} {
    %c0_i32 = arith.constant 0 : i32
    %0 = arith.cmpi eq, %arg1, %c0_i32 : i32
    %1 = arith.extui %0 : i1 to i32
    %c0_i32_0 = arith.constant 0 : i32
    %2 = arith.cmpi ne, %1, %c0_i32_0 : i32
    scf.if %2 {
      %cst_16 = arith.constant 0.000000e+00 : f32
      %20 = vector.broadcast %cst_16 : f32 to vector<16x32xf32>
      %c0_17 = arith.constant 0 : index
      %c0_18 = arith.constant 0 : index
      %21 = vector.load %arg8[%c0_17, %c0_18] : memref<16x32xf32, #tpu.memory_space<vmem>>, vector<16x32xf32>
      tpu.vector_store %arg8[%c0_17, %c0_18], %20 {strides = array<i32>} : memref<16x32xf32, #tpu.memory_space<vmem>>, vector<16x32xf32>,
    } else {
    }
    %c0 = arith.constant 0 : index
    %c0_1 = arith.constant 0 : index
    %3 = vector.load %arg2[%c0, %c0_1] : memref<16x32xbf16, #tpu.memory_space<vmem>>, vector<16x32xbf16>
    %c0_2 = arith.constant 0 : index
    %c0_3 = arith.constant 0 : index
    %4 = vector.load %arg3[%c0_2, %c0_3] : memref<32x128xbf16, #tpu.memory_space<vmem>>, vector<32x128xbf16>
    %cst = arith.constant dense<0.000000e+00> : vector<16x128xf32>
    %5 = tpu.matmul %3, %4, %cst {dimension_numbers = #tpu.dot_dimension_numbers<[1], [0], [0], [1], [0, 0, 1, 1], [], []>} : vector<16x32xbf16>, vector<32x128xbf16>, vector<16x128xf32> -> vector<16x128xf32>
    %c0_4 = arith.constant 0 : index
    %c0_5 = arith.constant 0 : index
    %6 = vector.load %arg4[%c0_4, %c0_5] : memref<1x128xf32, #tpu.memory_space<vmem>>, vector<1x128xf32>
    %7 = vector.broadcast %6 : vector<1x128xf32> to vector<16x128xf32>
    %8 = arith.addf %5, %7 : vector<16x128xf32>
    %cst_6 = arith.constant 0.000000e+00 : f32
    %9 = vector.broadcast %cst_6 : f32 to vector<16x128xf32>
    %10 = arith.maximumf %8, %9 : vector<16x128xf32>
    %c0_7 = arith.constant 0 : index
    %c0_8 = arith.constant 0 : index
    %11 = vector.load %arg8[%c0_7, %c0_8] : memref<16x32xf32, #tpu.memory_space<vmem>>, vector<16x32xf32>
    %12 = arith.truncf %10 : vector<16x128xf32> to vector<16x128xbf16>
    %c0_9 = arith.constant 0 : index
    %c0_10 = arith.constant 0 : index
    %13 = vector.load %arg5[%c0_9, %c0_10] : memref<128x32xbf16, #tpu.memory_space<vmem>>, vector<128x32xbf16>
    %cst_11 = arith.constant dense<0.000000e+00> : vector<16x32xf32>
    %14 = tpu.matmul %12, %13, %cst_11 {dimension_numbers = #tpu.dot_dimension_numbers<[1], [0], [0], [1], [0, 0, 1, 1], [], []>} : vector<16x128xbf16>, vector<128x32xbf16>, vector<16x32xf32> -> vector<16x32xf32>
    %15 = arith.addf %11, %14 : vector<16x32xf32>
    %c0_12 = arith.constant 0 : index
    %c0_13 = arith.constant 0 : index
    %16 = vector.load %arg8[%c0_12, %c0_13] : memref<16x32xf32, #tpu.memory_space<vmem>>, vector<16x32xf32>
    tpu.vector_store %arg8[%c0_12, %c0_13], %15 {strides = array<i32>} : memref<16x32xf32, #tpu.memory_space<vmem>>, vector<16x32xf32>,
    %c0_i32_14 = arith.constant 0 : i32
    %17 = arith.cmpi eq, %arg1, %c0_i32_14 : i32
    %18 = arith.extui %17 : i1 to i32
    %c0_i32_15 = arith.constant 0 : i32
    %19 = arith.cmpi ne, %18, %c0_i32_15 : i32
    scf.if %19 {
      %c0_16 = arith.constant 0 : index
      %c0_17 = arith.constant 0 : index
      %20 = vector.load %arg8[%c0_16, %c0_17] : memref<16x32xf32, #tpu.memory_space<vmem>>, vector<16x32xf32>
      %c0_18 = arith.constant 0 : index
      %c0_19 = arith.constant 0 : index
      %21 = vector.load %arg6[%c0_18, %c0_19] : memref<1x32xf32, #tpu.memory_space<vmem>>, vector<1x32xf32>
      %22 = vector.broadcast %21 : vector<1x32xf32> to vector<16x32xf32>
      %23 = arith.addf %20, %22 : vector<16x32xf32>
      %c0_20 = arith.constant 0 : index
      %c0_21 = arith.constant 0 : index
      %24 = vector.load %arg7[%c0_20, %c0_21] : memref<16x32xf32, #tpu.memory_space<vmem>>, vector<16x32xf32>
      tpu.vector_store %arg7[%c0_20, %c0_21], %23 {strides = array<i32>} : memref<16x32xf32, #tpu.memory_space<vmem>>, vector<16x32xf32>,
    } else {
    }
    return
  }
  func.func @transform_0(%arg0: i32, %arg1: i32) -> (i32, i32) {
    %c0_i32 = arith.constant 0 : i32
    %c0_i32_0 = arith.constant 0 : i32
    return %arg0, %c0_i32 : i32, i32
  }
  func.func @transform_1(%arg0: i32, %arg1: i32) -> (i32, i32) {
    %c0_i32 = arith.constant 0 : i32
    %c0_i32_0 = arith.constant 0 : i32
    return %c0_i32, %arg1 : i32, i32
  }
  func.func @transform_2(%arg0: i32, %arg1: i32) -> (i32, i32) {
    %c0_i32 = arith.constant 0 : i32
    %c0_i32_0 = arith.constant 0 : i32
    return %c0_i32, %arg1 : i32, i32
  }
  func.func @transform_3(%arg0: i32, %arg1: i32) -> (i32, i32) {
    %c0_i32 = arith.constant 0 : i32
    %c0_i32_0 = arith.constant 0 : i32
    return %arg1, %c0_i32 : i32, i32
  }
  func.func @transform_4(%arg0: i32, %arg1: i32) -> (i32, i32) {
    %c0_i32 = arith.constant 0 : i32
    %c0_i32_0 = arith.constant 0 : i32
    %c0_i32_1 = arith.constant 0 : i32
    return %c0_i32, %c0_i32_0 : i32, i32
  }
  func.func @transform_5(%arg0: i32, %arg1: i32) -> (i32, i32) {
    %c0_i32 = arith.constant 0 : i32
    %c0_i32_0 = arith.constant 0 : i32
    return %arg0, %c0_i32 : i32, i32
  }
}

</mosaic_0001>

<llo_original>
// kernel: tpu_custom_call.1
$region0: #{tpu_custom_call.1}
  #allocation0 [shape = 'u32[]', space=smem, size = 0x4, offset = 0x4, fixed_abs, tag = 'smem constant byte address 0x4 - core index']
  #allocation1 [shape = 'u32[72,128]{1,0:T(1,128)}', space=vmem, size = 0x9000, scoped, tag = 'internal scratch']
  #allocation2 [shape = 'f32[16,32]{1,0:T(8,128)}', space=vmem, size = 0x2000, scoped, tag = 'scratch operand']
  %s0 = inlined_call_operand.vmem [shape: bf16[16,32], index: 0, kind: input, shape index: {}]
  %s1 = inlined_call_operand.vmem [shape: bf16[32,128], index: 1, kind: input, shape index: {}]
  %s2 = inlined_call_operand.vmem [shape: f32[1,128], index: 2, kind: input, shape index: {}]
  %s3 = inlined_call_operand.vmem [shape: bf16[128,32], index: 3, kind: input, shape index: {}]
  %s4 = inlined_call_operand.vmem [shape: f32[1,32], index: 4, kind: input, shape index: {}]
  %s5 = inlined_call_operand.hbm [shape: f32[16,32], index: 5, kind: output, shape index: {}]
  %s6 = sld [smem:[#allocation0]]
  $region38: #{tpu_custom_call.1} parent=0
    _
  %s8 = ssub.s32 1, %s6
  %s9 = scalar_select 0, %s8, %s6
  $region1: #{tpu_custom_call.1} parent=0
    #allocation3 [shape = 'u8[8192]{0}', space=vmem, size = 0x2000, scoped, tag = 'output window, operand 0, single buffered']
    #allocation4 [shape = 's32[1]{0}', space=sflag, size = 0x4, scoped, tag = 'scoped memory for tpu_custom_call.1']
    %10 = vsyncpa [#allocation4], 0
    // Predicated region
    $region2: #{tpu_custom_call.1} parent=1 // pred_check
      _
    $region3: #{tpu_custom_call.1} parent=1 // pred_check_branch
      %12 = sbr.rel (0) target = $region5
    $region4: #{tpu_custom_call.1} parent=1 // pred_region
      _
    $region5: #{tpu_custom_call.1} parent=1 // pred_fallthru
      _
    // Predicated region
    $region6: #{tpu_custom_call.1} parent=1 // pred_check
      _
    $region7: #{tpu_custom_call.1} parent=1 // pred_check_branch
      %14 = sbr.rel (0) target = $region9
    $region8: #{tpu_custom_call.1} parent=1 // pred_region
      _
    $region9: #{tpu_custom_call.1} parent=1 // pred_fallthru
      _
    // Predicated region
    $region10: #{tpu_custom_call.1} parent=1 // pred_check
      _
    $region11: #{tpu_custom_call.1} parent=1 // pred_check_branch
      %16 = sbr.rel (0) target = $region13
    $region12: #{tpu_custom_call.1} parent=1 // pred_region
      _
    $region13: #{tpu_custom_call.1} parent=1 // pred_fallthru
      _
    // Predicated region
    $region14: #{tpu_custom_call.1} parent=1 // pred_check
      _
    $region15: #{tpu_custom_call.1} parent=1 // pred_check_branch
      %18 = sbr.rel (0) target = $region17
    $region16: #{tpu_custom_call.1} parent=1 // pred_region
      _
    $region17: #{tpu_custom_call.1} parent=1 // pred_fallthru
      _
    // Predicated region
    $region18: #{tpu_custom_call.1} parent=1 // pred_check
      _
    $region19: #{tpu_custom_call.1} parent=1 // pred_check_branch
      %20 = sbr.rel (0) target = $region21
    $region20: #{tpu_custom_call.1} parent=1 // pred_region
      _
    $region21: #{tpu_custom_call.1} parent=1 // pred_fallthru
      _
    %p22 = scmp.eq.s32.totalorder 0, 0
    // Predicated region
    $region22: #{tpu_custom_call.1} parent=1 // pred_check
      %p23 = pneg %p22
    $region23: #{tpu_custom_call.1} parent=1 // pred_check_branch
      %25 = sbr.rel (%p23) target = $region25
    $region24: #{tpu_custom_call.1} parent=1 // pred_region
      %vm26 = vcmask 261120
      %27 = vst.msk [vmem:[#allocation2] sm:$0xff] %vm26, 0.0
      %28 = vst.msk [vmem:[#allocation2 + $0x8] sm:$0xff] %vm26, 0.0
    $region25: #{tpu_custom_call.1} parent=1 // pred_fallthru
      _
    %v29 = vld [vmem:[%s0] sm:$0xf]
    %v30 = vld [vmem:[%s0 + $0x4] sm:$0xf]
    %v31 = vld [vmem:[%s1] sm:$0xf]
    %v32 = vld [vmem:[%s1 + $0x4] sm:$0xf]
    %v33 = vld [vmem:[%s1 + $0x8] sm:$0xf]
    %v34 = vld [vmem:[%s1 + $0xc] sm:$0xf]
    %v35 = vld [vmem:[%s2] sm:$0x1]
    %v37 = vperm.slane %v35, 0
    %v41 = vunpack.c.l.b16 %v29
    %v42 = vunpack.c.l.b16 %v30
    %v43 = vpack.c.b16 %v42, %v41
    %v48 = vunpack.c.l.b16 %v31
    %v49 = vunpack.c.l.b16 %v32
    %v50 = vunpack.c.l.b16 %v33
    %v51 = vunpack.c.l.b16 %v34
    %v52 = vpack.c.b16 %v49, %v48
    %v53 = vpack.c.b16 %v51, %v50
    %vm56 = vcmask 261120
    %v58 = vsel %vm56, %v43, 0
    %60 = vmatpush.bf16.msra.mxu0 0
    %61 = vmatpush.bf16.msra.mxu0 0
    %62 = vmatpush.bf16.msra.mxu0 0
    %63 = vmatpush.bf16.msra.mxu0 0
    %64 = vmatpush.bf16.msra.mxu0 0
    %65 = vmatpush.bf16.msra.mxu0 0
    %66 = vmatpush.bf16.msra.mxu0 %v53
    %67 = vmatpush.bf16.msra.mxu0 %v52
    %68 = vmatmul.bf16.gmra.mxu0 %v58
    %v69 = vpop.f32.mrf.mxu0
    %v70 = vadd.f32 %v37, %v69
    %v71 = vpop.f32.mrf.mxu0
    %v72 = vadd.f32 %v37, %v71
    %73 = vdwg.mxu0
    %v74 = vmax.f32 %v70, 0.0
    %v75 = vmax.f32 %v72, 0.0
    %v76 = vld [vmem:[#allocation2] sm:$0xff]
    %v77 = vld [vmem:[#allocation2 + $0x8] sm:$0xff]
    %v78 = vpack.c.bf16 %v75, %v74
    %v79 = vld [vmem:[%s3] sm:$0xf]
    %v80 = vld [vmem:[%s3 + $0x4] sm:$0xf]
    %v81 = vld [vmem:[%s3 + $0x8] sm:$0xf]
    %v82 = vld [vmem:[%s3 + $0xc] sm:$0xf]
    %v83 = vld [vmem:[%s3 + $0x10] sm:$0xf]
    %v84 = vld [vmem:[%s3 + $0x14] sm:$0xf]
    %v85 = vld [vmem:[%s3 + $0x18] sm:$0xf]
    %v86 = vld [vmem:[%s3 + $0x1c] sm:$0xf]
    %v87 = vld [vmem:[%s3 + $0x20] sm:$0xf]
    %v88 = vld [vmem:[%s3 + $0x24] sm:$0xf]
    %v89 = vld [vmem:[%s3 + $0x28] sm:$0xf]
    %v90 = vld [vmem:[%s3 + $0x2c] sm:$0xf]
    %v91 = vld [vmem:[%s3 + $0x30] sm:$0xf]
    %v92 = vld [vmem:[%s3 + $0x34] sm:$0xf]
    %v93 = vld [vmem:[%s3 + $0x38] sm:$0xf]
    %v94 = vld [vmem:[%s3 + $0x3c] sm:$0xf]
    %v111 = vunpack.c.l.b16 %v79
    %v112 = vunpack.c.l.b16 %v80
    %v113 = vunpack.c.l.b16 %v81
    %v114 = vunpack.c.l.b16 %v82
    %v115 = vunpack.c.l.b16 %v83
    %v116 = vunpack.c.l.b16 %v84
    %v117 = vunpack.c.l.b16 %v85
    %v118 = vunpack.c.l.b16 %v86
    %v119 = vunpack.c.l.b16 %v87
    %v120 = vunpack.c.l.b16 %v88
    %v121 = vunpack.c.l.b16 %v89
    %v122 = vunpack.c.l.b16 %v90
    %v123 = vunpack.c.l.b16 %v91
    %v124 = vunpack.c.l.b16 %v92
    %v125 = vunpack.c.l.b16 %v93
    %v126 = vunpack.c.l.b16 %v94
    %v127 = vpack.c.b16 %v112, %v111
    %v128 = vpack.c.b16 %v114, %v113
    %v129 = vpack.c.b16 %v116, %v115
    %v130 = vpack.c.b16 %v118, %v117
    %v131 = vpack.c.b16 %v120, %v119
    %v132 = vpack.c.b16 %v122, %v121
    %v133 = vpack.c.b16 %v124, %v123
    %v134 = vpack.c.b16 %v126, %v125
    %143 = vmatpush.bf16.msra.mxu0 %v134
    %144 = vmatpush.bf16.msra.mxu0 %v133
    %145 = vmatpush.bf16.msra.mxu0 %v132
    %146 = vmatpush.bf16.msra.mxu0 %v131
    %147 = vmatpush.bf16.msra.mxu0 %v130
    %148 = vmatpush.bf16.msra.mxu0 %v129
    %149 = vmatpush.bf16.msra.mxu0 %v128
    %150 = vmatpush.bf16.msra.mxu0 %v127
    %151 = vmatmul.bf16.gmra.mxu0 %v78
    %v152 = vpop.f32.mrf.mxu0
    %v153 = vadd.f32 0.0, %v152
    %v154 = vpop.f32.mrf.mxu0
    %v155 = vadd.f32 0.0, %v154
    %156 = vdwg.mxu0
    %v157 = vadd.f32 %v76, %v153
    %v158 = vadd.f32 %v77, %v155
    %159 = vst.msk [vmem:[#allocation2] sm:$0xff] %vm56, %v157
    %160 = vst.msk [vmem:[#allocation2 + $0x8] sm:$0xff] %vm56, %v158
    // Predicated region
    $region26: #{tpu_custom_call.1} parent=1 // pred_check
      %p161 = pneg %p22
    $region27: #{tpu_custom_call.1} parent=1 // pred_check_branch
      %163 = sbr.rel (%p161) target = $region29
    $region28: #{tpu_custom_call.1} parent=1 // pred_region
      %v164 = vld [vmem:[#allocation2] sm:$0xff]
      %v165 = vld [vmem:[#allocation2 + $0x8] sm:$0xff]
      %v166 = vld [vmem:[%s4] sm:$0x1]
      %v168 = vperm.slane %v166, 0
      %v170 = vadd.f32 %v164, %v168
      %v171 = vadd.f32 %v165, %v168
      %172 = vst.msk [vmem:[#allocation3] sm:$0xff] %vm56, %v170
      %173 = vst.msk [vmem:[#allocation3 + $0x8] sm:$0xff] %vm56, %v171
    $region29: #{tpu_custom_call.1} parent=1 // pred_fallthru
      _
    // Predicated region
    $region30: #{tpu_custom_call.1} parent=1 // pred_check
      _
    $region31: #{tpu_custom_call.1} parent=1 // pred_check_branch
      %175 = sbr.rel (0) target = $region33
    $region32: #{tpu_custom_call.1} parent=1 // pred_region
      %177 = vsyncadd [#allocation4], 0
      %s178 = sshll.u32 [#allocation3], 4
      %s179 = int_to_ptr.vmem [resolvable:$true] %s178
      %s180 = sshll.u32 %s5, 4
      %s181 = int_to_ptr.hbm [resolvable:$true] %s180
      %186 = dma.vmem_to_hbm [thread:$0]  %s179, 256, %s181, [#allocation4], 128, 128, 8
    $region33: #{tpu_custom_call.1} parent=1 // pred_fallthru
      _
    // Predicated region
    $region34: #{tpu_custom_call.1} parent=1 // pred_check
      _
    $region35: #{tpu_custom_call.1} parent=1 // pred_check_branch
      %188 = sbr.rel (0) target = $region37
    $region36: #{tpu_custom_call.1} parent=1 // pred_region
      %190 = dma.done [#allocation4], 256
    $region37: #{tpu_custom_call.1} parent=1 // pred_fallthru
      _
    %191 = vsyncpa [#allocation4], 1

</llo_original>
